<compile_context>
chip_gen: v7x
topology: tpu7x:2x2x1
jax: 0.10.0
libtpu: 0.0.40
codegen_flags: <defaults>
</compile_context>

<pallas_src>
import math

import jax
import jax.numpy as jnp
from jax import lax
from jax.experimental import pallas as pl
from jax.experimental.pallas import tpu as pltpu


_BLOCK_BUDGET_BYTES = 2 * 1024 * 1024  # per-step bytes across all fused inputs
_MAX_TH = 64                           # cap rows/block (bounds the in-block sublane permute)


def _choose_tiling(H, W, Ms, itemsizes):
    """Pick (n_m, th): M-tiles and rows-per-H-block so each step fits the budget."""
    bytes_per_h = sum(m * W * it for m, it in zip(Ms, itemsizes))

    if H % 8 == 0:
        th_cands = [c for c in range(8, min(H, _MAX_TH) + 1, 8) if H % c == 0] or [H]
    else:
        # TODO(synk): ragged-H tiling; for odd/small H fall back to a single full-H block.
        th_cands = [H]

    g = 0
    for m in Ms:
        g = math.gcd(g, m)
    g = max(g, 1)
    nm_cands = [d for d in range(1, g + 1) if g % d == 0]

    best = None  # (steps, -block_bytes, n_m, th): fewest steps, then biggest block
    for n_m in nm_cands:
        for th in th_cands:
            blk = th * bytes_per_h // n_m
            if blk > _BLOCK_BUDGET_BYTES:
                continue
            steps = n_m * (H // th)
            key = (steps, -blk)
            if best is None or key < best[:2]:
                best = (steps, -blk, n_m, th)
    if best is None:
        # Nothing fits the budget: take the smallest possible block.
        return nm_cands[-1], th_cands[0]
    return best[2], best[3]


def _make_vflip_kernel(n_tensors, th):
    def kernel(*refs):
        in_refs, out_refs = refs[:n_tensors], refs[n_tensors:]
        for x_ref, o_ref in zip(in_refs, out_refs):
            x = x_ref[...]  # (tm_i, th, W): already the mirrored H-block (via index_map)
            if th > 1:
                # Reverse the th rows within the block: sublane permute built from
                # static slices + concatenate (no MXU, no gather, dtype-exact).
                rows = [x[:, i:i + 1, :] for i in range(th - 1, -1, -1)]
                o_ref[...] = jnp.concatenate(rows, axis=1)
            else:
                o_ref[...] = x
    return kernel


def _vflip_fused(xs):
    """Flip a list of (M_i, H, W) arrays (shared H, W) along H in one pallas_call."""
    H, W = int(xs[0].shape[-2]), int(xs[0].shape[-1])
    Ms = [int(x.shape[0]) for x in xs]
    itemsizes = [x.dtype.itemsize for x in xs]

    n_m, th = _choose_tiling(H, W, Ms, itemsizes)
    n_h = H // th
    tms = [m // n_m for m in Ms]

    in_specs = [
        pl.BlockSpec((tm, th, W), lambda m, h: (m, n_h - 1 - h, 0)) for tm in tms
    ]
    out_specs = tuple(
        pl.BlockSpec((tm, th, W), lambda m, h: (m, h, 0)) for tm in tms
    )
    out_shape = tuple(jax.ShapeDtypeStruct(x.shape, x.dtype) for x in xs)

    return pl.pallas_call(
        _make_vflip_kernel(len(xs), th),
        out_shape=out_shape,
        grid=(n_m, n_h),
        in_specs=in_specs,
        out_specs=out_specs,
        compiler_params=pltpu.CompilerParams(
            dimension_semantics=("parallel", "parallel")),
    )(*xs)


def _vflip_pair(img, mask):
    img3 = img.reshape((-1,) + img.shape[-2:])
    mask3 = mask.reshape((-1,) + mask.shape[-2:])
    if img.shape[-2:] == mask.shape[-2:]:
        fimg3, fmask3 = _vflip_fused([img3, mask3])          # one fused launch
    else:                                                     # different spatial sizes
        (fimg3,) = _vflip_fused([img3])
        (fmask3,) = _vflip_fused([mask3])
    return fimg3.reshape(img.shape), fmask3.reshape(mask.shape)


@jax.jit
def random_vertical_flip(img, mask, p, key):
    """Pallas equivalent of RandomVerticalFlip(p).forward(img, mask)."""
    do_flip = jax.random.uniform(key, ()) < p                 # torch.rand(1) < p
    # Short-circuit: the kernel only runs when a flip actually happens.
    return lax.cond(do_flip, lambda ops: _vflip_pair(*ops), lambda ops: ops, (img, mask))


if __name__ == "__main__":
    key = jax.random.PRNGKey(0)
    k_img, k_mask, k_flip = jax.random.split(key, 3)

    N, C, H, W = 2, 4, 16, 16
    img = jax.random.normal(k_img, (N, C, H, W), dtype=jnp.float32)
    mask = jax.random.randint(k_mask, (N, 1, H, W), 0, 21, dtype=jnp.int32)
    p = 0.5

    out_img, out_mask = random_vertical_flip(img, mask, p, k_flip)
    jax.block_until_ready((out_img, out_mask))

    # Reference semantics (same random decision as the wrapper).
    flip = jax.random.uniform(k_flip, ()) < p
    ref_img = jnp.where(flip, jnp.flip(img, axis=-2), img)
    ref_mask = jnp.where(flip, jnp.flip(mask, axis=-2), mask)
    assert jnp.array_equal(out_img, ref_img), "img mismatch (random draw)"
    assert jnp.array_equal(out_mask, ref_mask), "mask mismatch (random draw)"

    # Force both branches so the Pallas flip kernel is exercised regardless of the draw.
    f_img, f_mask = random_vertical_flip(img, mask, 1.0, k_flip)
    jax.block_until_ready((f_img, f_mask))
    assert jnp.array_equal(f_img, jnp.flip(img, axis=-2)), "forced-flip img mismatch"
    assert jnp.array_equal(f_mask, jnp.flip(mask, axis=-2)), "forced-flip mask mismatch"

    n_img, n_mask = random_vertical_flip(img, mask, 0.0, k_flip)
    jax.block_until_ready((n_img, n_mask))
    assert jnp.array_equal(n_img, img) and jnp.array_equal(n_mask, mask), "no-flip mismatch"

    print("KERNEL_OK")
</pallas_src>

<mosaic_0001>
module attributes {stable_mosaic.version = 11 : i64} {
  func.func @kernel(%arg0: i32, %arg1: i32, %arg2: memref<8x16x16xf32, #tpu.memory_space<vmem>>, %arg3: memref<2x16x16xi32, #tpu.memory_space<vmem>>, %arg4: memref<8x16x16xf32, #tpu.memory_space<vmem>>, %arg5: memref<2x16x16xi32, #tpu.memory_space<vmem>>) attributes {dimension_semantics = [#tpu.dimension_semantics<parallel>, #tpu.dimension_semantics<parallel>], iteration_bounds = array<i64: 1, 1>, scalar_prefetch = 0 : i64, scratch_operands = 0 : i64, tpu.core_type = #tpu.core_type<tc>, window_params = [{transform_indices = @transform_0, window_bounds = array<i64: 8, 16, 16>}, {transform_indices = @transform_1, window_bounds = array<i64: 2, 16, 16>}, {transform_indices = @transform_2, window_bounds = array<i64: 8, 16, 16>}, {transform_indices = @transform_3, window_bounds = array<i64: 2, 16, 16>}]} {
    %c0 = arith.constant 0 : index
    %c0_0 = arith.constant 0 : index
    %c0_1 = arith.constant 0 : index
    %0 = vector.load %arg2[%c0, %c0_0, %c0_1] : memref<8x16x16xf32, #tpu.memory_space<vmem>>, vector<8x16x16xf32>
    %1 = vector.extract_strided_slice %0 {offsets = [0, 15, 0], sizes = [8, 1, 16], strides = [1, 1, 1]} : vector<8x16x16xf32> to vector<8x1x16xf32>
    %2 = vector.extract_strided_slice %0 {offsets = [0, 14, 0], sizes = [8, 1, 16], strides = [1, 1, 1]} : vector<8x16x16xf32> to vector<8x1x16xf32>
    %3 = vector.extract_strided_slice %0 {offsets = [0, 13, 0], sizes = [8, 1, 16], strides = [1, 1, 1]} : vector<8x16x16xf32> to vector<8x1x16xf32>
    %4 = vector.extract_strided_slice %0 {offsets = [0, 12, 0], sizes = [8, 1, 16], strides = [1, 1, 1]} : vector<8x16x16xf32> to vector<8x1x16xf32>
    %5 = vector.extract_strided_slice %0 {offsets = [0, 11, 0], sizes = [8, 1, 16], strides = [1, 1, 1]} : vector<8x16x16xf32> to vector<8x1x16xf32>
    %6 = vector.extract_strided_slice %0 {offsets = [0, 10, 0], sizes = [8, 1, 16], strides = [1, 1, 1]} : vector<8x16x16xf32> to vector<8x1x16xf32>
    %7 = vector.extract_strided_slice %0 {offsets = [0, 9, 0], sizes = [8, 1, 16], strides = [1, 1, 1]} : vector<8x16x16xf32> to vector<8x1x16xf32>
    %8 = vector.extract_strided_slice %0 {offsets = [0, 8, 0], sizes = [8, 1, 16], strides = [1, 1, 1]} : vector<8x16x16xf32> to vector<8x1x16xf32>
    %9 = vector.extract_strided_slice %0 {offsets = [0, 7, 0], sizes = [8, 1, 16], strides = [1, 1, 1]} : vector<8x16x16xf32> to vector<8x1x16xf32>
    %10 = vector.extract_strided_slice %0 {offsets = [0, 6, 0], sizes = [8, 1, 16], strides = [1, 1, 1]} : vector<8x16x16xf32> to vector<8x1x16xf32>
    %11 = vector.extract_strided_slice %0 {offsets = [0, 5, 0], sizes = [8, 1, 16], strides = [1, 1, 1]} : vector<8x16x16xf32> to vector<8x1x16xf32>
    %12 = vector.extract_strided_slice %0 {offsets = [0, 4, 0], sizes = [8, 1, 16], strides = [1, 1, 1]} : vector<8x16x16xf32> to vector<8x1x16xf32>
    %13 = vector.extract_strided_slice %0 {offsets = [0, 3, 0], sizes = [8, 1, 16], strides = [1, 1, 1]} : vector<8x16x16xf32> to vector<8x1x16xf32>
    %14 = vector.extract_strided_slice %0 {offsets = [0, 2, 0], sizes = [8, 1, 16], strides = [1, 1, 1]} : vector<8x16x16xf32> to vector<8x1x16xf32>
    %15 = vector.extract_strided_slice %0 {offsets = [0, 1, 0], sizes = [8, 1, 16], strides = [1, 1, 1]} : vector<8x16x16xf32> to vector<8x1x16xf32>
    %16 = vector.extract_strided_slice %0 {offsets = [0, 0, 0], sizes = [8, 1, 16], strides = [1, 1, 1]} : vector<8x16x16xf32> to vector<8x1x16xf32>
    %17 = tpu.concatenate %1, %2, %3, %4, %5, %6, %7, %8, %9, %10, %11, %12, %13, %14, %15, %16 in 1 : vector<8x1x16xf32>, vector<8x1x16xf32>, vector<8x1x16xf32>, vector<8x1x16xf32>, vector<8x1x16xf32>, vector<8x1x16xf32>, vector<8x1x16xf32>, vector<8x1x16xf32>, vector<8x1x16xf32>, vector<8x1x16xf32>, vector<8x1x16xf32>, vector<8x1x16xf32>, vector<8x1x16xf32>, vector<8x1x16xf32>, vector<8x1x16xf32>, vector<8x1x16xf32> -> vector<8x16x16xf32>
    %c0_2 = arith.constant 0 : index
    %c0_3 = arith.constant 0 : index
    %c0_4 = arith.constant 0 : index
    %18 = vector.load %arg4[%c0_2, %c0_3, %c0_4] : memref<8x16x16xf32, #tpu.memory_space<vmem>>, vector<8x16x16xf32>
    tpu.vector_store %arg4[%c0_2, %c0_3, %c0_4], %17 {strides = array<i32>} : memref<8x16x16xf32, #tpu.memory_space<vmem>>, vector<8x16x16xf32>,
    %c0_5 = arith.constant 0 : index
    %c0_6 = arith.constant 0 : index
    %c0_7 = arith.constant 0 : index
    %19 = vector.load %arg3[%c0_5, %c0_6, %c0_7] : memref<2x16x16xi32, #tpu.memory_space<vmem>>, vector<2x16x16xi32>
    %20 = vector.extract_strided_slice %19 {offsets = [0, 15, 0], sizes = [2, 1, 16], strides = [1, 1, 1]} : vector<2x16x16xi32> to vector<2x1x16xi32>
    %21 = vector.extract_strided_slice %19 {offsets = [0, 14, 0], sizes = [2, 1, 16], strides = [1, 1, 1]} : vector<2x16x16xi32> to vector<2x1x16xi32>
    %22 = vector.extract_strided_slice %19 {offsets = [0, 13, 0], sizes = [2, 1, 16], strides = [1, 1, 1]} : vector<2x16x16xi32> to vector<2x1x16xi32>
    %23 = vector.extract_strided_slice %19 {offsets = [0, 12, 0], sizes = [2, 1, 16], strides = [1, 1, 1]} : vector<2x16x16xi32> to vector<2x1x16xi32>
    %24 = vector.extract_strided_slice %19 {offsets = [0, 11, 0], sizes = [2, 1, 16], strides = [1, 1, 1]} : vector<2x16x16xi32> to vector<2x1x16xi32>
    %25 = vector.extract_strided_slice %19 {offsets = [0, 10, 0], sizes = [2, 1, 16], strides = [1, 1, 1]} : vector<2x16x16xi32> to vector<2x1x16xi32>
    %26 = vector.extract_strided_slice %19 {offsets = [0, 9, 0], sizes = [2, 1, 16], strides = [1, 1, 1]} : vector<2x16x16xi32> to vector<2x1x16xi32>
    %27 = vector.extract_strided_slice %19 {offsets = [0, 8, 0], sizes = [2, 1, 16], strides = [1, 1, 1]} : vector<2x16x16xi32> to vector<2x1x16xi32>
    %28 = vector.extract_strided_slice %19 {offsets = [0, 7, 0], sizes = [2, 1, 16], strides = [1, 1, 1]} : vector<2x16x16xi32> to vector<2x1x16xi32>
    %29 = vector.extract_strided_slice %19 {offsets = [0, 6, 0], sizes = [2, 1, 16], strides = [1, 1, 1]} : vector<2x16x16xi32> to vector<2x1x16xi32>
    %30 = vector.extract_strided_slice %19 {offsets = [0, 5, 0], sizes = [2, 1, 16], strides = [1, 1, 1]} : vector<2x16x16xi32> to vector<2x1x16xi32>
    %31 = vector.extract_strided_slice %19 {offsets = [0, 4, 0], sizes = [2, 1, 16], strides = [1, 1, 1]} : vector<2x16x16xi32> to vector<2x1x16xi32>
    %32 = vector.extract_strided_slice %19 {offsets = [0, 3, 0], sizes = [2, 1, 16], strides = [1, 1, 1]} : vector<2x16x16xi32> to vector<2x1x16xi32>
    %33 = vector.extract_strided_slice %19 {offsets = [0, 2, 0], sizes = [2, 1, 16], strides = [1, 1, 1]} : vector<2x16x16xi32> to vector<2x1x16xi32>
    %34 = vector.extract_strided_slice %19 {offsets = [0, 1, 0], sizes = [2, 1, 16], strides = [1, 1, 1]} : vector<2x16x16xi32> to vector<2x1x16xi32>
    %35 = vector.extract_strided_slice %19 {offsets = [0, 0, 0], sizes = [2, 1, 16], strides = [1, 1, 1]} : vector<2x16x16xi32> to vector<2x1x16xi32>
    %36 = tpu.concatenate %20, %21, %22, %23, %24, %25, %26, %27, %28, %29, %30, %31, %32, %33, %34, %35 in 1 : vector<2x1x16xi32>, vector<2x1x16xi32>, vector<2x1x16xi32>, vector<2x1x16xi32>, vector<2x1x16xi32>, vector<2x1x16xi32>, vector<2x1x16xi32>, vector<2x1x16xi32>, vector<2x1x16xi32>, vector<2x1x16xi32>, vector<2x1x16xi32>, vector<2x1x16xi32>, vector<2x1x16xi32>, vector<2x1x16xi32>, vector<2x1x16xi32>, vector<2x1x16xi32> -> vector<2x16x16xi32>
    %c0_8 = arith.constant 0 : index
    %c0_9 = arith.constant 0 : index
    %c0_10 = arith.constant 0 : index
    %37 = vector.load %arg5[%c0_8, %c0_9, %c0_10] : memref<2x16x16xi32, #tpu.memory_space<vmem>>, vector<2x16x16xi32>
    tpu.vector_store %arg5[%c0_8, %c0_9, %c0_10], %36 {strides = array<i32>} : memref<2x16x16xi32, #tpu.memory_space<vmem>>, vector<2x16x16xi32>,
    return
  }
  func.func @transform_0(%arg0: i32, %arg1: i32) -> (i32, i32, i32) {
    %c0_i32 = arith.constant 0 : i32
    %0 = arith.subi %c0_i32, %arg1 : i32
    %c0_i32_0 = arith.constant 0 : i32
    %c0_i32_1 = arith.constant 0 : i32
    return %arg0, %0, %c0_i32_0 : i32, i32, i32
  }
  func.func @transform_1(%arg0: i32, %arg1: i32) -> (i32, i32, i32) {
    %c0_i32 = arith.constant 0 : i32
    %0 = arith.subi %c0_i32, %arg1 : i32
    %c0_i32_0 = arith.constant 0 : i32
    %c0_i32_1 = arith.constant 0 : i32
    return %arg0, %0, %c0_i32_0 : i32, i32, i32
  }
  func.func @transform_2(%arg0: i32, %arg1: i32) -> (i32, i32, i32) {
    %c0_i32 = arith.constant 0 : i32
    %c0_i32_0 = arith.constant 0 : i32
    return %arg0, %arg1, %c0_i32 : i32, i32, i32
  }
  func.func @transform_3(%arg0: i32, %arg1: i32) -> (i32, i32, i32) {
    %c0_i32 = arith.constant 0 : i32
    %c0_i32_0 = arith.constant 0 : i32
    return %arg0, %arg1, %c0_i32 : i32, i32, i32
  }
}

</mosaic_0001>

<llo_original>
// kernel: branch_1_fun.1
$region0: #{branch_1_fun.1}
  #allocation0 [shape = 'u32[]', space=smem, size = 0x4, offset = 0x4, fixed_abs, tag = 'smem constant byte address 0x4 - core index']
  #allocation1 [shape = 'u32[144,128]{1,0:T(1,128)}', space=vmem, size = 0x12000, scoped, tag = 'internal scratch']
  %s0 = inlined_call_operand.vmem [shape: f32[8,16,16], index: 0, kind: input, shape index: {}]
  %s1 = inlined_call_operand.vmem [shape: s32[2,16,16], index: 1, kind: input, shape index: {}]
  %s2 = inlined_call_operand.hbm [shape: f32[8,16,16], index: 2, kind: output, shape index: {0}]
  %s3 = inlined_call_operand.hbm [shape: s32[2,16,16], index: 3, kind: output, shape index: {1}]
  %4 = xla_tuple %s2, %s3
  %s5 = sld [smem:[#allocation0]]
  $region26: #{branch_1_fun.1} parent=0
    _
  %s7 = ssub.s32 1, %s5
  %s8 = scalar_select 0, %s7, %s5
  $region1: #{branch_1_fun.1} parent=0
    #allocation2 [shape = 'u8[65536]{0}', space=vmem, size = 0x10000, scoped, tag = 'output window, operand 0, single buffered']
    #allocation3 [shape = 's32[1]{0}', space=sflag, size = 0x4, scoped, tag = 'scoped memory for branch_1_fun.1']
    #allocation4 [shape = 'u8[16384]{0}', space=vmem, size = 0x4000, scoped, tag = 'output window, operand 1, single buffered']
    #allocation5 [shape = 's32[1]{0}', space=sflag, size = 0x4, scoped, tag = 'scoped memory for branch_1_fun.1']
    %9 = vsyncpa [#allocation3], 0
    %10 = vsyncpa [#allocation5], 0
    // Predicated region
    $region2: #{branch_1_fun.1} parent=1 // pred_check
      _
    $region3: #{branch_1_fun.1} parent=1 // pred_check_branch
      %12 = sbr.rel (0) target = $region5
    $region4: #{branch_1_fun.1} parent=1 // pred_region
      %s13 = ssub.s32 0, 0
      %s14 = smul.u32 2, %s13
      %p15 = scmp.lt.s32.totalorder %s14, 1
      %s16 = scalar_select %p15, %s14, 1
      %s17 = smul.addr %s16, 8
      %s18 = scalar_lea.vmem %s0, %s17
      %s19 = ssub.s32 0, 0
      %s20 = smul.u32 2, %s19
    $region5: #{branch_1_fun.1} parent=1 // pred_fallthru
      _
    // Predicated region
    $region6: #{branch_1_fun.1} parent=1 // pred_check
      _
    $region7: #{branch_1_fun.1} parent=1 // pred_check_branch
      %22 = sbr.rel (0) target = $region9
    $region8: #{branch_1_fun.1} parent=1 // pred_region
      %s23 = ssub.s32 0, 0
      %s24 = smul.u32 2, %s23
      %p25 = scmp.lt.s32.totalorder %s24, 1
      %s26 = scalar_select %p25, %s24, 1
      %s27 = smul.addr %s26, 8
      %s28 = scalar_lea.vmem %s1, %s27
      %s29 = ssub.s32 0, 0
      %s30 = smul.u32 2, %s29
    $region9: #{branch_1_fun.1} parent=1 // pred_fallthru
      _
    %s31 = ssub.s32 0, 0
    %s32 = smul.u32 2, %s31
    %p33 = scmp.lt.s32.totalorder %s32, 1
    %s34 = scalar_select %p33, %s32, 1
    %s35 = smul.addr %s34, 8
    %s36 = scalar_lea.vmem %s0, %s35
    %s37 = ssub.s32 0, 0
    %s38 = smul.u32 2, %s37
    %p39 = scmp.lt.s32.totalorder %s38, 1
    %s40 = scalar_select %p39, %s38, 1
    %s41 = smul.addr %s40, 8
    %s42 = scalar_lea.vmem %s1, %s41
    %s43 = ssub.s32 0, 0
    %s44 = smul.u32 2, %s43
    %p45 = scmp.lt.s32.totalorder %s44, 1
    %s46 = scalar_select %p45, %s44, 1
    %s47 = smul.addr %s46, 8
    %s48 = scalar_lea.vmem %s0, %s47
    %s49 = ssub.s32 0, 0
    %s50 = smul.u32 2, %s49
    %s51 = ssub.s32 0, 0
    %s52 = smul.u32 2, %s51
    %p53 = scmp.lt.s32.totalorder %s52, 1
    %s54 = scalar_select %p53, %s52, 1
    %s55 = smul.addr %s54, 8
    %s56 = scalar_lea.vmem %s1, %s55
    %s57 = ssub.s32 0, 0
    %s58 = smul.u32 2, %s57
    %v59 = vld [vmem:[%s48] sm:$0xff]
    %v60 = vld [vmem:[%s48 + $0x8] sm:$0xff]
    %v61 = vld [vmem:[%s48 + $0x10] sm:$0xff]
    %v62 = vld [vmem:[%s48 + $0x18] sm:$0xff]
    %v63 = vld [vmem:[%s48 + $0x20] sm:$0xff]
    %v64 = vld [vmem:[%s48 + $0x28] sm:$0xff]
    %v65 = vld [vmem:[%s48 + $0x30] sm:$0xff]
    %v66 = vld [vmem:[%s48 + $0x38] sm:$0xff]
    %v67 = vld [vmem:[%s48 + $0x40] sm:$0xff]
    %v68 = vld [vmem:[%s48 + $0x48] sm:$0xff]
    %v69 = vld [vmem:[%s48 + $0x50] sm:$0xff]
    %v70 = vld [vmem:[%s48 + $0x58] sm:$0xff]
    %v71 = vld [vmem:[%s48 + $0x60] sm:$0xff]
    %v72 = vld [vmem:[%s48 + $0x68] sm:$0xff]
    %v73 = vld [vmem:[%s48 + $0x70] sm:$0xff]
    %v74 = vld [vmem:[%s48 + $0x78] sm:$0xff]
    %v83 = vrot.slane %v60, 7
    %v84 = vrot.slane %v62, 7
    %v85 = vrot.slane %v64, 7
    %v86 = vrot.slane %v66, 7
    %v87 = vrot.slane %v68, 7
    %v88 = vrot.slane %v70, 7
    %v89 = vrot.slane %v72, 7
    %v90 = vrot.slane %v74, 7
    %v99 = vrot.slane %v60, 5
    %v100 = vrot.slane %v62, 5
    %v101 = vrot.slane %v64, 5
    %v102 = vrot.slane %v66, 5
    %v103 = vrot.slane %v68, 5
    %v104 = vrot.slane %v70, 5
    %v105 = vrot.slane %v72, 5
    %v106 = vrot.slane %v74, 5
    %v115 = vrot.slane %v60, 3
    %v116 = vrot.slane %v62, 3
    %v117 = vrot.slane %v64, 3
    %v118 = vrot.slane %v66, 3
    %v119 = vrot.slane %v68, 3
    %v120 = vrot.slane %v70, 3
    %v121 = vrot.slane %v72, 3
    %v122 = vrot.slane %v74, 3
    %v131 = vrot.slane %v60, 1
    %v132 = vrot.slane %v62, 1
    %v133 = vrot.slane %v64, 1
    %v134 = vrot.slane %v66, 1
    %v135 = vrot.slane %v68, 1
    %v136 = vrot.slane %v70, 1
    %v137 = vrot.slane %v72, 1
    %v138 = vrot.slane %v74, 1
    %v155 = vrot.slane %v59, 7
    %v156 = vrot.slane %v61, 7
    %v157 = vrot.slane %v63, 7
    %v158 = vrot.slane %v65, 7
    %v159 = vrot.slane %v67, 7
    %v160 = vrot.slane %v69, 7
    %v161 = vrot.slane %v71, 7
    %v162 = vrot.slane %v73, 7
    %v171 = vrot.slane %v59, 5
    %v172 = vrot.slane %v61, 5
    %v173 = vrot.slane %v63, 5
    %v174 = vrot.slane %v65, 5
    %v175 = vrot.slane %v67, 5
    %v176 = vrot.slane %v69, 5
    %v177 = vrot.slane %v71, 5
    %v178 = vrot.slane %v73, 5
    %v187 = vrot.slane %v59, 3
    %v188 = vrot.slane %v61, 3
    %v189 = vrot.slane %v63, 3
    %v190 = vrot.slane %v65, 3
    %v191 = vrot.slane %v67, 3
    %v192 = vrot.slane %v69, 3
    %v193 = vrot.slane %v71, 3
    %v194 = vrot.slane %v73, 3
    %v203 = vrot.slane %v59, 1
    %v204 = vrot.slane %v61, 1
    %v205 = vrot.slane %v63, 1
    %v206 = vrot.slane %v65, 1
    %v207 = vrot.slane %v67, 1
    %v208 = vrot.slane %v69, 1
    %v209 = vrot.slane %v71, 1
    %v210 = vrot.slane %v73, 1
    %vm219 = vcmask 1040384
    %v220 = vsel %vm219, %v83, %v99
    %v221 = vsel %vm219, %v84, %v100
    %v222 = vsel %vm219, %v85, %v101
    %v223 = vsel %vm219, %v86, %v102
    %v224 = vsel %vm219, %v87, %v103
    %v225 = vsel %vm219, %v88, %v104
    %v226 = vsel %vm219, %v89, %v105
    %v227 = vsel %vm219, %v90, %v106
    %vm228 = vcmask 1041408
    %v229 = vsel %vm228, %v220, %v115
    %v230 = vsel %vm228, %v221, %v116
    %v231 = vsel %vm228, %v222, %v117
    %v232 = vsel %vm228, %v223, %v118
    %v233 = vsel %vm228, %v224, %v119
    %v234 = vsel %vm228, %v225, %v120
    %v235 = vsel %vm228, %v226, %v121
    %v236 = vsel %vm228, %v227, %v122
    %vm237 = vcmask 1042432
    %v238 = vsel %vm237, %v229, %v131
    %v239 = vsel %vm237, %v230, %v132
    %v240 = vsel %vm237, %v231, %v133
    %v241 = vsel %vm237, %v232, %v134
    %v242 = vsel %vm237, %v233, %v135
    %v243 = vsel %vm237, %v234, %v136
    %v244 = vsel %vm237, %v235, %v137
    %v245 = vsel %vm237, %v236, %v138
    %vm246 = vcmask 1043456
    %v247 = vsel %vm246, %v238, %v83
    %v248 = vsel %vm246, %v239, %v84
    %v249 = vsel %vm246, %v240, %v85
    %v250 = vsel %vm246, %v241, %v86
    %v251 = vsel %vm246, %v242, %v87
    %v252 = vsel %vm246, %v243, %v88
    %v253 = vsel %vm246, %v244, %v89
    %v254 = vsel %vm246, %v245, %v90
    %vm255 = vcmask 1044480
    %v256 = vsel %vm255, %v247, %v99
    %v257 = vsel %vm255, %v248, %v100
    %v258 = vsel %vm255, %v249, %v101
    %v259 = vsel %vm255, %v250, %v102
    %v260 = vsel %vm255, %v251, %v103
    %v261 = vsel %vm255, %v252, %v104
    %v262 = vsel %vm255, %v253, %v105
    %v263 = vsel %vm255, %v254, %v106
    %vm264 = vcmask 1045504
    %v265 = vsel %vm264, %v256, %v115
    %v266 = vsel %vm264, %v257, %v116
    %v267 = vsel %vm264, %v258, %v117
    %v268 = vsel %vm264, %v259, %v118
    %v269 = vsel %vm264, %v260, %v119
    %v270 = vsel %vm264, %v261, %v120
    %v271 = vsel %vm264, %v262, %v121
    %v272 = vsel %vm264, %v263, %v122
    %vm273 = vcmask 1046528
    %v274 = vsel %vm273, %v265, %v131
    %v275 = vsel %vm273, %v266, %v132
    %v276 = vsel %vm273, %v267, %v133
    %v277 = vsel %vm273, %v268, %v134
    %v278 = vsel %vm273, %v269, %v135
    %v279 = vsel %vm273, %v270, %v136
    %v280 = vsel %vm273, %v271, %v137
    %v281 = vsel %vm273, %v272, %v138
    %v282 = vsel %vm219, %v155, %v171
    %v283 = vsel %vm219, %v156, %v172
    %v284 = vsel %vm219, %v157, %v173
    %v285 = vsel %vm219, %v158, %v174
    %v286 = vsel %vm219, %v159, %v175
    %v287 = vsel %vm219, %v160, %v176
    %v288 = vsel %vm219, %v161, %v177
    %v289 = vsel %vm219, %v162, %v178
    %v290 = vsel %vm228, %v282, %v187
    %v291 = vsel %vm228, %v283, %v188
    %v292 = vsel %vm228, %v284, %v189
    %v293 = vsel %vm228, %v285, %v190
    %v294 = vsel %vm228, %v286, %v191
    %v295 = vsel %vm228, %v287, %v192
    %v296 = vsel %vm228, %v288, %v193
    %v297 = vsel %vm228, %v289, %v194
    %v298 = vsel %vm237, %v290, %v203
    %v299 = vsel %vm237, %v291, %v204
    %v300 = vsel %vm237, %v292, %v205
    %v301 = vsel %vm237, %v293, %v206
    %v302 = vsel %vm237, %v294, %v207
    %v303 = vsel %vm237, %v295, %v208
    %v304 = vsel %vm237, %v296, %v209
    %v305 = vsel %vm237, %v297, %v210
    %v306 = vsel %vm246, %v298, %v155
    %v307 = vsel %vm246, %v299, %v156
    %v308 = vsel %vm246, %v300, %v157
    %v309 = vsel %vm246, %v301, %v158
    %v310 = vsel %vm246, %v302, %v159
    %v311 = vsel %vm246, %v303, %v160
    %v312 = vsel %vm246, %v304, %v161
    %v313 = vsel %vm246, %v305, %v162
    %v314 = vsel %vm255, %v306, %v171
    %v315 = vsel %vm255, %v307, %v172
    %v316 = vsel %vm255, %v308, %v173
    %v317 = vsel %vm255, %v309, %v174
    %v318 = vsel %vm255, %v310, %v175
    %v319 = vsel %vm255, %v311, %v176
    %v320 = vsel %vm255, %v312, %v177
    %v321 = vsel %vm255, %v313, %v178
    %v322 = vsel %vm264, %v314, %v187
    %v323 = vsel %vm264, %v315, %v188
    %v324 = vsel %vm264, %v316, %v189
    %v325 = vsel %vm264, %v317, %v190
    %v326 = vsel %vm264, %v318, %v191
    %v327 = vsel %vm264, %v319, %v192
    %v328 = vsel %vm264, %v320, %v193
    %v329 = vsel %vm264, %v321, %v194
    %v330 = vsel %vm273, %v322, %v203
    %v331 = vsel %vm273, %v323, %v204
    %v332 = vsel %vm273, %v324, %v205
    %v333 = vsel %vm273, %v325, %v206
    %v334 = vsel %vm273, %v326, %v207
    %v335 = vsel %vm273, %v327, %v208
    %v336 = vsel %vm273, %v328, %v209
    %v337 = vsel %vm273, %v329, %v210
    %vm338 = vcmask 130048
    %339 = vst.msk [vmem:[#allocation2] sm:$0xff] %vm338, %v274
    %340 = vst.msk [vmem:[#allocation2 + $0x8] sm:$0xff] %vm338, %v330
    %341 = vst.msk [vmem:[#allocation2 + $0x10] sm:$0xff] %vm338, %v275
    %342 = vst.msk [vmem:[#allocation2 + $0x18] sm:$0xff] %vm338, %v331
    %343 = vst.msk [vmem:[#allocation2 + $0x20] sm:$0xff] %vm338, %v276
    %344 = vst.msk [vmem:[#allocation2 + $0x28] sm:$0xff] %vm338, %v332
    %345 = vst.msk [vmem:[#allocation2 + $0x30] sm:$0xff] %vm338, %v277
    %346 = vst.msk [vmem:[#allocation2 + $0x38] sm:$0xff] %vm338, %v333
    %347 = vst.msk [vmem:[#allocation2 + $0x40] sm:$0xff] %vm338, %v278
    %348 = vst.msk [vmem:[#allocation2 + $0x48] sm:$0xff] %vm338, %v334
    %349 = vst.msk [vmem:[#allocation2 + $0x50] sm:$0xff] %vm338, %v279
    %350 = vst.msk [vmem:[#allocation2 + $0x58] sm:$0xff] %vm338, %v335
    %351 = vst.msk [vmem:[#allocation2 + $0x60] sm:$0xff] %vm338, %v280
    %352 = vst.msk [vmem:[#allocation2 + $0x68] sm:$0xff] %vm338, %v336
    %353 = vst.msk [vmem:[#allocation2 + $0x70] sm:$0xff] %vm338, %v281
    %354 = vst.msk [vmem:[#allocation2 + $0x78] sm:$0xff] %vm338, %v337
    %v355 = vld [vmem:[%s56] sm:$0xff]
    %v356 = vld [vmem:[%s56 + $0x8] sm:$0xff]
    %v357 = vld [vmem:[%s56 + $0x10] sm:$0xff]
    %v358 = vld [vmem:[%s56 + $0x18] sm:$0xff]
    %v359 = vrot.slane %v356, 7
    %v360 = vrot.slane %v358, 7
    %v361 = vrot.slane %v356, 5
    %v362 = vrot.slane %v358, 5
    %v363 = vrot.slane %v356, 3
    %v364 = vrot.slane %v358, 3
    %v365 = vrot.slane %v356, 1
    %v366 = vrot.slane %v358, 1
    %v367 = vrot.slane %v355, 7
    %v368 = vrot.slane %v357, 7
    %v369 = vrot.slane %v355, 5
    %v370 = vrot.slane %v357, 5
    %v371 = vrot.slane %v355, 3
    %v372 = vrot.slane %v357, 3
    %v373 = vrot.slane %v355, 1
    %v374 = vrot.slane %v357, 1
    %v375 = vsel %vm219, %v359, %v361
    %v376 = vsel %vm219, %v360, %v362
    %v377 = vsel %vm228, %v375, %v363
    %v378 = vsel %vm228, %v376, %v364
    %v379 = vsel %vm237, %v377, %v365
    %v380 = vsel %vm237, %v378, %v366
    %v381 = vsel %vm246, %v379, %v359
    %v382 = vsel %vm246, %v380, %v360
    %v383 = vsel %vm255, %v381, %v361
    %v384 = vsel %vm255, %v382, %v362
    %v385 = vsel %vm264, %v383, %v363
    %v386 = vsel %vm264, %v384, %v364
    %v387 = vsel %vm273, %v385, %v365
    %v388 = vsel %vm273, %v386, %v366
    %v389 = vsel %vm219, %v367, %v369
    %v390 = vsel %vm219, %v368, %v370
    %v391 = vsel %vm228, %v389, %v371
    %v392 = vsel %vm228, %v390, %v372
    %v393 = vsel %vm237, %v391, %v373
    %v394 = vsel %vm237, %v392, %v374
    %v395 = vsel %vm246, %v393, %v367
    %v396 = vsel %vm246, %v394, %v368
    %v397 = vsel %vm255, %v395, %v369
    %v398 = vsel %vm255, %v396, %v370
    %v399 = vsel %vm264, %v397, %v371
    %v400 = vsel %vm264, %v398, %v372
    %v401 = vsel %vm273, %v399, %v373
    %v402 = vsel %vm273, %v400, %v374
    %403 = vst.msk [vmem:[#allocation4] sm:$0xff] %vm338, %v387
    %404 = vst.msk [vmem:[#allocation4 + $0x8] sm:$0xff] %vm338, %v401
    %405 = vst.msk [vmem:[#allocation4 + $0x10] sm:$0xff] %vm338, %v388
    %406 = vst.msk [vmem:[#allocation4 + $0x18] sm:$0xff] %vm338, %v402
    // Predicated region
    $region10: #{branch_1_fun.1} parent=1 // pred_check
      _
    $region11: #{branch_1_fun.1} parent=1 // pred_check_branch
      %408 = sbr.rel (0) target = $region13
    $region12: #{branch_1_fun.1} parent=1 // pred_region
      %s410 = ssub.s32 2048, 2048
      %411 = vsyncadd [#allocation3], %s410
      %s412 = sshll.u32 [#allocation2], 4
      %s413 = int_to_ptr.vmem [resolvable:$true] %s412
      %418 = dma.vmem_to_hbm [thread:$0]  %s413, 2048, %s2, [#allocation3], 128, 128, 8
    $region13: #{branch_1_fun.1} parent=1 // pred_fallthru
      _
    // Predicated region
    $region14: #{branch_1_fun.1} parent=1 // pred_check
      _
    $region15: #{branch_1_fun.1} parent=1 // pred_check_branch
      %420 = sbr.rel (0) target = $region17
    $region16: #{branch_1_fun.1} parent=1 // pred_region
      %s422 = ssub.s32 512, 512
      %423 = vsyncadd [#allocation5], %s422
      %s424 = sshll.u32 [#allocation4], 4
      %s425 = int_to_ptr.vmem [resolvable:$true] %s424
      %430 = dma.vmem_to_hbm [thread:$0]  %s425, 512, %s3, [#allocation5], 128, 128, 8
    $region17: #{branch_1_fun.1} parent=1 // pred_fallthru
      _
    // Predicated region
    $region18: #{branch_1_fun.1} parent=1 // pred_check
      _
    $region19: #{branch_1_fun.1} parent=1 // pred_check_branch
      %432 = sbr.rel (0) target = $region21
    $region20: #{branch_1_fun.1} parent=1 // pred_region
      %433 = dma.done [#allocation3], 2048
    $region21: #{branch_1_fun.1} parent=1 // pred_fallthru
      _
    // Predicated region
    $region22: #{branch_1_fun.1} parent=1 // pred_check
      _
    $region23: #{branch_1_fun.1} parent=1 // pred_check_branch
      %435 = sbr.rel (0) target = $region25
    $region24: #{branch_1_fun.1} parent=1 // pred_region
      %436 = dma.done [#allocation5], 512
    $region25: #{branch_1_fun.1} parent=1 // pred_fallthru
      _
    %437 = vsyncpa [#allocation3], 1
    %438 = vsyncpa [#allocation5], 1

</llo_original>
